<compile_context>
chip_gen: v5e
topology: v5e:2x2
jax: 0.10.0
libtpu: 0.0.40
codegen_flags: <defaults>
</compile_context>

<pallas_src>
import jax
import jax.numpy as jnp
from jax import lax
from jax.experimental import pallas as pl
from jax.experimental.pallas import tpu as pltpu

# ---- model hyper-parameters (from the PyTorch module) ----
EMBED_SIZE = 128
HIDDEN_SIZE = 64
NUM_CLASSES = 3
VOCAB_SIZE = 10000
FC1_SIZE = 128          # fc1 output width
OUT_PAD = 128           # lane-dense padded class dimension


def _sigmoid(x):
    # 1/(1+exp(-x)) with the divide on the (otherwise idle) EUP reciprocal unit.
    return pl.reciprocal(1.0 + jnp.exp(-x), approx=True)


def lstm_text_kernel(x_ref,      # (T, B, E)   bf16, time-major embedded tokens
                     wih_ref,    # (E, 4H)     bf16, input->gates weights (i|f|g|o)
                     whh_ref,    # (H, 4H)     bf16, hidden->gates weights (i|f|g|o)
                     b_ref,      # (1, 4H)     f32,  combined bias (b_ih + b_hh)
                     w1_ref,     # (H, 128)    bf16, fc1 weight
                     b1_ref,     # (1, 128)    f32,  fc1 bias
                     w2_ref,     # (128, 128)  bf16, fc2 weight (padded to 128 cols)
                     b2_ref,     # (1, 128)    f32,  fc2 bias (padded)
                     out_ref,    # (B, 128)    f32,  lane-dense logits (first C valid)
                     xg_ref):    # (T, B, 4H)  f32,  VMEM scratch: precomputed input gates
    T, B, E = x_ref.shape
    H = whh_ref.shape[0]
    G = 4 * H

    # --- Hoisted input projection for ALL timesteps at once, bias folded in. ---
    # (T*B, E) @ (E, 4H) -> one MXU call with 64 rows instead of T calls with 8 rows.
    x2d = x_ref[...].reshape(T * B, E)                                  # bf16
    xg = jnp.dot(x2d, wih_ref[...],
                 preferred_element_type=jnp.float32) + b_ref[...]       # (T*B, 4H) f32
    xg_ref[...] = xg.reshape(T, B, G)

    # --- Recurrence: per step only h @ W_hh + elementwise gates. ---
    def step(t, carry):
        h, c = carry
        gates = xg_ref[t] + jnp.dot(h.astype(jnp.bfloat16), whh_ref[...],
                                    preferred_element_type=jnp.float32)  # (B, 4H) f32
        sig = _sigmoid(gates)                 # full-width sigmoid over all 4H columns
        i = sig[:, 0 * H:1 * H]
        f = sig[:, 1 * H:2 * H]
        o = sig[:, 3 * H:4 * H]
        g = jnp.tanh(gates[:, 2 * H:3 * H])
        c_new = f * c + i * g
        h_new = o * jnp.tanh(c_new)
        return (h_new, c_new)

    h0 = jnp.zeros((B, H), jnp.float32)
    c0 = jnp.zeros((B, H), jnp.float32)
    h_last, _ = lax.fori_loop(0, T, step, (h0, c0), unroll=True)

    # fc1 + ReLU
    z1 = jnp.dot(h_last.astype(jnp.bfloat16), w1_ref[...],
                 preferred_element_type=jnp.float32) + b1_ref[...]       # (B, 128)
    z1 = jnp.maximum(z1, 0.0)

    # dropout(p=0.5) is identity in eval/inference mode.
    # TODO(synk): training-mode dropout (stateful PRNG mask) intentionally not applied.

    # fc2 into a lane-dense (B, 128) tile; wrapper slices first NUM_CLASSES columns.
    out_ref[...] = jnp.dot(z1.astype(jnp.bfloat16), w2_ref[...],
                           preferred_element_type=jnp.float32) + b2_ref[...]


def lstm_text_forward(token_ids, params):
    """token_ids: (B, T) int32; returns (B, NUM_CLASSES) float32 logits."""
    B, T = token_ids.shape

    # Embedding lookup (glue, plain JAX gather), then time-major + bf16 for the kernel.
    x_emb = jnp.take(params["embedding"], token_ids, axis=0)             # (B, T, E)
    x_tm = jnp.transpose(x_emb, (1, 0, 2)).astype(jnp.bfloat16)          # (T, B, E)

    vmem = pl.BlockSpec(memory_space=pltpu.MemorySpace.VMEM)

    # TODO(synk): when B/T scale, add a grid over T (x tiled, "arbitrary") with h/c carried
    # in VMEM scratch, and a "parallel" batch axis so v7x's second TensorCore is used.
    out_padded = pl.pallas_call(
        lstm_text_kernel,
        out_shape=jax.ShapeDtypeStruct((B, OUT_PAD), jnp.float32),
        in_specs=[vmem] * 8,
        out_specs=vmem,
        scratch_shapes=[pltpu.VMEM((T, B, 4 * HIDDEN_SIZE), jnp.float32)],
    )(
        x_tm,
        params["w_ih_t"],
        params["w_hh_t"],
        params["b_gates"],
        params["w1_t"],
        params["b1"],
        params["w2_pad_t"],
        params["b2_pad"],
    )
    return out_padded[:, :NUM_CLASSES]


def init_params(key):
    """Deterministic parameter init (uniform ranges mimicking PyTorch defaults)."""
    ks = jax.random.split(key, 9)
    H, E, C, V = HIDDEN_SIZE, EMBED_SIZE, NUM_CLASSES, VOCAB_SIZE
    k_lstm = 1.0 / jnp.sqrt(H)
    k_fc1 = 1.0 / jnp.sqrt(H)
    k_fc2 = 1.0 / jnp.sqrt(FC1_SIZE)

    embedding = jax.random.normal(ks[0], (V, E), jnp.float32)  # N(0,1) like nn.Embedding

    # LSTM weights stored transposed: (in, 4H), gate order i|f|g|o (PyTorch order).
    w_ih_t = jax.random.uniform(ks[1], (E, 4 * H), jnp.float32, -k_lstm, k_lstm)
    w_hh_t = jax.random.uniform(ks[2], (H, 4 * H), jnp.float32, -k_lstm, k_lstm)
    b_ih = jax.random.uniform(ks[3], (4 * H,), jnp.float32, -k_lstm, k_lstm)
    b_hh = jax.random.uniform(ks[4], (4 * H,), jnp.float32, -k_lstm, k_lstm)
    b_gates = (b_ih + b_hh).reshape(1, 4 * H)

    w1_t = jax.random.uniform(ks[5], (H, FC1_SIZE), jnp.float32, -k_fc1, k_fc1)
    b1 = jax.random.uniform(ks[6], (1, FC1_SIZE), jnp.float32, -k_fc1, k_fc1)
    w2_t = jax.random.uniform(ks[7], (FC1_SIZE, C), jnp.float32, -k_fc2, k_fc2)
    b2 = jax.random.uniform(ks[8], (1, C), jnp.float32, -k_fc2, k_fc2)

    # Lane-dense padding of the class dimension (extra columns are zero -> sliced off).
    w2_pad = jnp.zeros((FC1_SIZE, OUT_PAD), jnp.float32).at[:, :C].set(w2_t)
    b2_pad = jnp.zeros((1, OUT_PAD), jnp.float32).at[:, :C].set(b2)

    return {
        "embedding": embedding,
        # MXU operands in bf16 (accumulation stays f32 inside the kernel).
        "w_ih_t": w_ih_t.astype(jnp.bfloat16),
        "w_hh_t": w_hh_t.astype(jnp.bfloat16),
        "b_gates": b_gates,
        "w1_t": w1_t.astype(jnp.bfloat16),
        "b1": b1,
        "w2_pad_t": w2_pad.astype(jnp.bfloat16),
        "b2_pad": b2_pad,
    }


if __name__ == "__main__":
    key = jax.random.PRNGKey(0)
    k_params, k_tokens = jax.random.split(key)

    params = init_params(k_params)

    B, T = 8, 8  # small batch / sequence length
    token_ids = jax.random.randint(k_tokens, (B, T), 0, VOCAB_SIZE, dtype=jnp.int32)

    logits = lstm_text_forward(token_ids, params)
    logits = jax.block_until_ready(logits)

    assert logits.shape == (B, NUM_CLASSES)
    assert logits.dtype == jnp.float32
    assert bool(jnp.all(jnp.isfinite(logits)))
    print("KERNEL_OK")
</pallas_src>

<mosaic_0001>
module attributes {stable_mosaic.version = 11 : i64} {
  func.func @lstm_text_kernel(%arg0: memref<8x8x128xbf16, #tpu.memory_space<vmem>>, %arg1: memref<128x256xbf16, #tpu.memory_space<vmem>>, %arg2: memref<64x256xbf16, #tpu.memory_space<vmem>>, %arg3: memref<1x256xf32, #tpu.memory_space<vmem>>, %arg4: memref<64x128xbf16, #tpu.memory_space<vmem>>, %arg5: memref<1x128xf32, #tpu.memory_space<vmem>>, %arg6: memref<128x128xbf16, #tpu.memory_space<vmem>>, %arg7: memref<1x128xf32, #tpu.memory_space<vmem>>, %arg8: memref<8x128xf32, #tpu.memory_space<vmem>>, %arg9: memref<8x8x256xf32, #tpu.memory_space<vmem>>) attributes {dimension_semantics = [], scalar_prefetch = 0 : i64, scratch_operands = 1 : i64, tpu.core_type = #tpu.core_type<tc>} {
    %c0 = arith.constant 0 : index
    %c0_0 = arith.constant 0 : index
    %c0_1 = arith.constant 0 : index
    %0 = vector.load %arg0[%c0, %c0_0, %c0_1] : memref<8x8x128xbf16, #tpu.memory_space<vmem>>, vector<8x8x128xbf16>
    %1 = vector.shape_cast %0 : vector<8x8x128xbf16> to vector<64x128xbf16>
    %c0_2 = arith.constant 0 : index
    %c0_3 = arith.constant 0 : index
    %2 = vector.load %arg1[%c0_2, %c0_3] : memref<128x256xbf16, #tpu.memory_space<vmem>>, vector<128x256xbf16>
    %cst = arith.constant dense<0.000000e+00> : vector<64x256xf32>
    %3 = tpu.matmul %1, %2, %cst {dimension_numbers = #tpu.dot_dimension_numbers<[1], [0], [0], [1], [0, 0, 1, 1], [], []>} : vector<64x128xbf16>, vector<128x256xbf16>, vector<64x256xf32> -> vector<64x256xf32>
    %c0_4 = arith.constant 0 : index
    %c0_5 = arith.constant 0 : index
    %4 = vector.load %arg3[%c0_4, %c0_5] : memref<1x256xf32, #tpu.memory_space<vmem>>, vector<1x256xf32>
    %5 = vector.broadcast %4 : vector<1x256xf32> to vector<64x256xf32>
    %6 = arith.addf %3, %5 : vector<64x256xf32>
    %7 = vector.shape_cast %6 : vector<64x256xf32> to vector<8x8x256xf32>
    %c0_6 = arith.constant 0 : index
    %c0_7 = arith.constant 0 : index
    %c0_8 = arith.constant 0 : index
    %8 = vector.load %arg9[%c0_6, %c0_7, %c0_8] : memref<8x8x256xf32, #tpu.memory_space<vmem>>, vector<8x8x256xf32>
    tpu.vector_store %arg9[%c0_6, %c0_7, %c0_8], %7 {strides = array<i32>} : memref<8x8x256xf32, #tpu.memory_space<vmem>>, vector<8x8x256xf32>,
    %cst_9 = arith.constant 0.000000e+00 : f32
    %9 = vector.broadcast %cst_9 : f32 to vector<8x64xf32>
    %cst_10 = arith.constant 0.000000e+00 : f32
    %10 = vector.broadcast %cst_10 : f32 to vector<8x64xf32>
    %c0_i32 = arith.constant 0 : i32
    %11 = arith.index_cast %c0_i32 : i32 to index
    %c0_11 = arith.constant 0 : index
    %c0_12 = arith.constant 0 : index
    %12 = vector.load %arg9[%11, %c0_11, %c0_12] : memref<8x8x256xf32, #tpu.memory_space<vmem>>, vector<1x8x256xf32>
    %13 = vector.shape_cast %12 : vector<1x8x256xf32> to vector<8x256xf32>
    %14 = arith.truncf %9 : vector<8x64xf32> to vector<8x64xbf16>
    %c0_13 = arith.constant 0 : index
    %c0_14 = arith.constant 0 : index
    %15 = vector.load %arg2[%c0_13, %c0_14] : memref<64x256xbf16, #tpu.memory_space<vmem>>, vector<64x256xbf16>
    %cst_15 = arith.constant dense<0.000000e+00> : vector<8x256xf32>
    %16 = tpu.matmul %14, %15, %cst_15 {dimension_numbers = #tpu.dot_dimension_numbers<[1], [0], [0], [1], [0, 0, 1, 1], [], []>} : vector<8x64xbf16>, vector<64x256xbf16>, vector<8x256xf32> -> vector<8x256xf32>
    %17 = arith.addf %13, %16 : vector<8x256xf32>
    %cst_16 = arith.constant 0.000000e+00 : f32
    %18 = vector.broadcast %cst_16 : f32 to vector<8x256xf32>
    %19 = arith.subf %18, %17 : vector<8x256xf32>
    %20 = math.exp %19 : vector<8x256xf32>
    %cst_17 = arith.constant 1.000000e+00 : f32
    %21 = vector.broadcast %cst_17 : f32 to vector<8x256xf32>
    %22 = arith.addf %21, %20 : vector<8x256xf32>
    %23 = tpu.reciprocal %22 {approx = true} : vector<8x256xf32> -> vector<8x256xf32>
    %24 = vector.extract_strided_slice %23 {offsets = [0, 0], sizes = [8, 64], strides = [1, 1]} : vector<8x256xf32> to vector<8x64xf32>
    %25 = vector.extract_strided_slice %23 {offsets = [0, 64], sizes = [8, 64], strides = [1, 1]} : vector<8x256xf32> to vector<8x64xf32>
    %26 = vector.extract_strided_slice %23 {offsets = [0, 192], sizes = [8, 64], strides = [1, 1]} : vector<8x256xf32> to vector<8x64xf32>
    %27 = vector.extract_strided_slice %17 {offsets = [0, 128], sizes = [8, 64], strides = [1, 1]} : vector<8x256xf32> to vector<8x64xf32>
    %28 = math.tanh %27 : vector<8x64xf32>
    %29 = arith.mulf %25, %10 : vector<8x64xf32>
    %30 = arith.mulf %24, %28 : vector<8x64xf32>
    %31 = arith.addf %29, %30 : vector<8x64xf32>
    %32 = math.tanh %31 : vector<8x64xf32>
    %33 = arith.mulf %26, %32 : vector<8x64xf32>
    %c1_i32 = arith.constant 1 : i32
    %34 = arith.index_cast %c1_i32 : i32 to index
    %c0_18 = arith.constant 0 : index
    %c0_19 = arith.constant 0 : index
    %35 = vector.load %arg9[%34, %c0_18, %c0_19] : memref<8x8x256xf32, #tpu.memory_space<vmem>>, vector<1x8x256xf32>
    %36 = vector.shape_cast %35 : vector<1x8x256xf32> to vector<8x256xf32>
    %37 = arith.truncf %33 : vector<8x64xf32> to vector<8x64xbf16>
    %c0_20 = arith.constant 0 : index
    %c0_21 = arith.constant 0 : index
    %38 = vector.load %arg2[%c0_20, %c0_21] : memref<64x256xbf16, #tpu.memory_space<vmem>>, vector<64x256xbf16>
    %cst_22 = arith.constant dense<0.000000e+00> : vector<8x256xf32>
    %39 = tpu.matmul %37, %38, %cst_22 {dimension_numbers = #tpu.dot_dimension_numbers<[1], [0], [0], [1], [0, 0, 1, 1], [], []>} : vector<8x64xbf16>, vector<64x256xbf16>, vector<8x256xf32> -> vector<8x256xf32>
    %40 = arith.addf %36, %39 : vector<8x256xf32>
    %cst_23 = arith.constant 0.000000e+00 : f32
    %41 = vector.broadcast %cst_23 : f32 to vector<8x256xf32>
    %42 = arith.subf %41, %40 : vector<8x256xf32>
    %43 = math.exp %42 : vector<8x256xf32>
    %cst_24 = arith.constant 1.000000e+00 : f32
    %44 = vector.broadcast %cst_24 : f32 to vector<8x256xf32>
    %45 = arith.addf %44, %43 : vector<8x256xf32>
    %46 = tpu.reciprocal %45 {approx = true} : vector<8x256xf32> -> vector<8x256xf32>
    %47 = vector.extract_strided_slice %46 {offsets = [0, 0], sizes = [8, 64], strides = [1, 1]} : vector<8x256xf32> to vector<8x64xf32>
    %48 = vector.extract_strided_slice %46 {offsets = [0, 64], sizes = [8, 64], strides = [1, 1]} : vector<8x256xf32> to vector<8x64xf32>
    %49 = vector.extract_strided_slice %46 {offsets = [0, 192], sizes = [8, 64], strides = [1, 1]} : vector<8x256xf32> to vector<8x64xf32>
    %50 = vector.extract_strided_slice %40 {offsets = [0, 128], sizes = [8, 64], strides = [1, 1]} : vector<8x256xf32> to vector<8x64xf32>
    %51 = math.tanh %50 : vector<8x64xf32>
    %52 = arith.mulf %48, %31 : vector<8x64xf32>
    %53 = arith.mulf %47, %51 : vector<8x64xf32>
    %54 = arith.addf %52, %53 : vector<8x64xf32>
    %55 = math.tanh %54 : vector<8x64xf32>
    %56 = arith.mulf %49, %55 : vector<8x64xf32>
    %c2_i32 = arith.constant 2 : i32
    %57 = arith.index_cast %c2_i32 : i32 to index
    %c0_25 = arith.constant 0 : index
    %c0_26 = arith.constant 0 : index
    %58 = vector.load %arg9[%57, %c0_25, %c0_26] : memref<8x8x256xf32, #tpu.memory_space<vmem>>, vector<1x8x256xf32>
    %59 = vector.shape_cast %58 : vector<1x8x256xf32> to vector<8x256xf32>
    %60 = arith.truncf %56 : vector<8x64xf32> to vector<8x64xbf16>
    %c0_27 = arith.constant 0 : index
    %c0_28 = arith.constant 0 : index
    %61 = vector.load %arg2[%c0_27, %c0_28] : memref<64x256xbf16, #tpu.memory_space<vmem>>, vector<64x256xbf16>
    %cst_29 = arith.constant dense<0.000000e+00> : vector<8x256xf32>
    %62 = tpu.matmul %60, %61, %cst_29 {dimension_numbers = #tpu.dot_dimension_numbers<[1], [0], [0], [1], [0, 0, 1, 1], [], []>} : vector<8x64xbf16>, vector<64x256xbf16>, vector<8x256xf32> -> vector<8x256xf32>
    %63 = arith.addf %59, %62 : vector<8x256xf32>
    %cst_30 = arith.constant 0.000000e+00 : f32
    %64 = vector.broadcast %cst_30 : f32 to vector<8x256xf32>
    %65 = arith.subf %64, %63 : vector<8x256xf32>
    %66 = math.exp %65 : vector<8x256xf32>
    %cst_31 = arith.constant 1.000000e+00 : f32
    %67 = vector.broadcast %cst_31 : f32 to vector<8x256xf32>
    %68 = arith.addf %67, %66 : vector<8x256xf32>
    %69 = tpu.reciprocal %68 {approx = true} : vector<8x256xf32> -> vector<8x256xf32>
    %70 = vector.extract_strided_slice %69 {offsets = [0, 0], sizes = [8, 64], strides = [1, 1]} : vector<8x256xf32> to vector<8x64xf32>
    %71 = vector.extract_strided_slice %69 {offsets = [0, 64], sizes = [8, 64], strides = [1, 1]} : vector<8x256xf32> to vector<8x64xf32>
    %72 = vector.extract_strided_slice %69 {offsets = [0, 192], sizes = [8, 64], strides = [1, 1]} : vector<8x256xf32> to vector<8x64xf32>
    %73 = vector.extract_strided_slice %63 {offsets = [0, 128], sizes = [8, 64], strides = [1, 1]} : vector<8x256xf32> to vector<8x64xf32>
    %74 = math.tanh %73 : vector<8x64xf32>
    %75 = arith.mulf %71, %54 : vector<8x64xf32>
    %76 = arith.mulf %70, %74 : vector<8x64xf32>
    %77 = arith.addf %75, %76 : vector<8x64xf32>
    %78 = math.tanh %77 : vector<8x64xf32>
    %79 = arith.mulf %72, %78 : vector<8x64xf32>
    %c3_i32 = arith.constant 3 : i32
    %80 = arith.index_cast %c3_i32 : i32 to index
    %c0_32 = arith.constant 0 : index
    %c0_33 = arith.constant 0 : index
    %81 = vector.load %arg9[%80, %c0_32, %c0_33] : memref<8x8x256xf32, #tpu.memory_space<vmem>>, vector<1x8x256xf32>
    %82 = vector.shape_cast %81 : vector<1x8x256xf32> to vector<8x256xf32>
    %83 = arith.truncf %79 : vector<8x64xf32> to vector<8x64xbf16>
    %c0_34 = arith.constant 0 : index
    %c0_35 = arith.constant 0 : index
    %84 = vector.load %arg2[%c0_34, %c0_35] : memref<64x256xbf16, #tpu.memory_space<vmem>>, vector<64x256xbf16>
    %cst_36 = arith.constant dense<0.000000e+00> : vector<8x256xf32>
    %85 = tpu.matmul %83, %84, %cst_36 {dimension_numbers = #tpu.dot_dimension_numbers<[1], [0], [0], [1], [0, 0, 1, 1], [], []>} : vector<8x64xbf16>, vector<64x256xbf16>, vector<8x256xf32> -> vector<8x256xf32>
    %86 = arith.addf %82, %85 : vector<8x256xf32>
    %cst_37 = arith.constant 0.000000e+00 : f32
    %87 = vector.broadcast %cst_37 : f32 to vector<8x256xf32>
    %88 = arith.subf %87, %86 : vector<8x256xf32>
    %89 = math.exp %88 : vector<8x256xf32>
    %cst_38 = arith.constant 1.000000e+00 : f32
    %90 = vector.broadcast %cst_38 : f32 to vector<8x256xf32>
    %91 = arith.addf %90, %89 : vector<8x256xf32>
    %92 = tpu.reciprocal %91 {approx = true} : vector<8x256xf32> -> vector<8x256xf32>
    %93 = vector.extract_strided_slice %92 {offsets = [0, 0], sizes = [8, 64], strides = [1, 1]} : vector<8x256xf32> to vector<8x64xf32>
    %94 = vector.extract_strided_slice %92 {offsets = [0, 64], sizes = [8, 64], strides = [1, 1]} : vector<8x256xf32> to vector<8x64xf32>
    %95 = vector.extract_strided_slice %92 {offsets = [0, 192], sizes = [8, 64], strides = [1, 1]} : vector<8x256xf32> to vector<8x64xf32>
    %96 = vector.extract_strided_slice %86 {offsets = [0, 128], sizes = [8, 64], strides = [1, 1]} : vector<8x256xf32> to vector<8x64xf32>
    %97 = math.tanh %96 : vector<8x64xf32>
    %98 = arith.mulf %94, %77 : vector<8x64xf32>
    %99 = arith.mulf %93, %97 : vector<8x64xf32>
    %100 = arith.addf %98, %99 : vector<8x64xf32>
    %101 = math.tanh %100 : vector<8x64xf32>
    %102 = arith.mulf %95, %101 : vector<8x64xf32>
    %c4_i32 = arith.constant 4 : i32
    %103 = arith.index_cast %c4_i32 : i32 to index
    %c0_39 = arith.constant 0 : index
    %c0_40 = arith.constant 0 : index
    %104 = vector.load %arg9[%103, %c0_39, %c0_40] : memref<8x8x256xf32, #tpu.memory_space<vmem>>, vector<1x8x256xf32>
    %105 = vector.shape_cast %104 : vector<1x8x256xf32> to vector<8x256xf32>
    %106 = arith.truncf %102 : vector<8x64xf32> to vector<8x64xbf16>
    %c0_41 = arith.constant 0 : index
    %c0_42 = arith.constant 0 : index
    %107 = vector.load %arg2[%c0_41, %c0_42] : memref<64x256xbf16, #tpu.memory_space<vmem>>, vector<64x256xbf16>
    %cst_43 = arith.constant dense<0.000000e+00> : vector<8x256xf32>
    %108 = tpu.matmul %106, %107, %cst_43 {dimension_numbers = #tpu.dot_dimension_numbers<[1], [0], [0], [1], [0, 0, 1, 1], [], []>} : vector<8x64xbf16>, vector<64x256xbf16>, vector<8x256xf32> -> vector<8x256xf32>
    %109 = arith.addf %105, %108 : vector<8x256xf32>
    %cst_44 = arith.constant 0.000000e+00 : f32
    %110 = vector.broadcast %cst_44 : f32 to vector<8x256xf32>
    %111 = arith.subf %110, %109 : vector<8x256xf32>
    %112 = math.exp %111 : vector<8x256xf32>
    %cst_45 = arith.constant 1.000000e+00 : f32
    %113 = vector.broadcast %cst_45 : f32 to vector<8x256xf32>
    %114 = arith.addf %113, %112 : vector<8x256xf32>
    %115 = tpu.reciprocal %114 {approx = true} : vector<8x256xf32> -> vector<8x256xf32>
    %116 = vector.extract_strided_slice %115 {offsets = [0, 0], sizes = [8, 64], strides = [1, 1]} : vector<8x256xf32> to vector<8x64xf32>
    %117 = vector.extract_strided_slice %115 {offsets = [0, 64], sizes = [8, 64], strides = [1, 1]} : vector<8x256xf32> to vector<8x64xf32>
    %118 = vector.extract_strided_slice %115 {offsets = [0, 192], sizes = [8, 64], strides = [1, 1]} : vector<8x256xf32> to vector<8x64xf32>
    %119 = vector.extract_strided_slice %109 {offsets = [0, 128], sizes = [8, 64], strides = [1, 1]} : vector<8x256xf32> to vector<8x64xf32>
    %120 = math.tanh %119 : vector<8x64xf32>
    %121 = arith.mulf %117, %100 : vector<8x64xf32>
    %122 = arith.mulf %116, %120 : vector<8x64xf32>
    %123 = arith.addf %121, %122 : vector<8x64xf32>
    %124 = math.tanh %123 : vector<8x64xf32>
    %125 = arith.mulf %118, %124 : vector<8x64xf32>
    %c5_i32 = arith.constant 5 : i32
    %126 = arith.index_cast %c5_i32 : i32 to index
    %c0_46 = arith.constant 0 : index
    %c0_47 = arith.constant 0 : index
    %127 = vector.load %arg9[%126, %c0_46, %c0_47] : memref<8x8x256xf32, #tpu.memory_space<vmem>>, vector<1x8x256xf32>
    %128 = vector.shape_cast %127 : vector<1x8x256xf32> to vector<8x256xf32>
    %129 = arith.truncf %125 : vector<8x64xf32> to vector<8x64xbf16>
    %c0_48 = arith.constant 0 : index
    %c0_49 = arith.constant 0 : index
    %130 = vector.load %arg2[%c0_48, %c0_49] : memref<64x256xbf16, #tpu.memory_space<vmem>>, vector<64x256xbf16>
    %cst_50 = arith.constant dense<0.000000e+00> : vector<8x256xf32>
    %131 = tpu.matmul %129, %130, %cst_50 {dimension_numbers = #tpu.dot_dimension_numbers<[1], [0], [0], [1], [0, 0, 1, 1], [], []>} : vector<8x64xbf16>, vector<64x256xbf16>, vector<8x256xf32> -> vector<8x256xf32>
    %132 = arith.addf %128, %131 : vector<8x256xf32>
    %cst_51 = arith.constant 0.000000e+00 : f32
    %133 = vector.broadcast %cst_51 : f32 to vector<8x256xf32>
    %134 = arith.subf %133, %132 : vector<8x256xf32>
    %135 = math.exp %134 : vector<8x256xf32>
    %cst_52 = arith.constant 1.000000e+00 : f32
    %136 = vector.broadcast %cst_52 : f32 to vector<8x256xf32>
    %137 = arith.addf %136, %135 : vector<8x256xf32>
    %138 = tpu.reciprocal %137 {approx = true} : vector<8x256xf32> -> vector<8x256xf32>
    %139 = vector.extract_strided_slice %138 {offsets = [0, 0], sizes = [8, 64], strides = [1, 1]} : vector<8x256xf32> to vector<8x64xf32>
    %140 = vector.extract_strided_slice %138 {offsets = [0, 64], sizes = [8, 64], strides = [1, 1]} : vector<8x256xf32> to vector<8x64xf32>
    %141 = vector.extract_strided_slice %138 {offsets = [0, 192], sizes = [8, 64], strides = [1, 1]} : vector<8x256xf32> to vector<8x64xf32>
    %142 = vector.extract_strided_slice %132 {offsets = [0, 128], sizes = [8, 64], strides = [1, 1]} : vector<8x256xf32> to vector<8x64xf32>
    %143 = math.tanh %142 : vector<8x64xf32>
    %144 = arith.mulf %140, %123 : vector<8x64xf32>
    %145 = arith.mulf %139, %143 : vector<8x64xf32>
    %146 = arith.addf %144, %145 : vector<8x64xf32>
    %147 = math.tanh %146 : vector<8x64xf32>
    %148 = arith.mulf %141, %147 : vector<8x64xf32>
    %c6_i32 = arith.constant 6 : i32
    %149 = arith.index_cast %c6_i32 : i32 to index
    %c0_53 = arith.constant 0 : index
    %c0_54 = arith.constant 0 : index
    %150 = vector.load %arg9[%149, %c0_53, %c0_54] : memref<8x8x256xf32, #tpu.memory_space<vmem>>, vector<1x8x256xf32>
    %151 = vector.shape_cast %150 : vector<1x8x256xf32> to vector<8x256xf32>
    %152 = arith.truncf %148 : vector<8x64xf32> to vector<8x64xbf16>
    %c0_55 = arith.constant 0 : index
    %c0_56 = arith.constant 0 : index
    %153 = vector.load %arg2[%c0_55, %c0_56] : memref<64x256xbf16, #tpu.memory_space<vmem>>, vector<64x256xbf16>
    %cst_57 = arith.constant dense<0.000000e+00> : vector<8x256xf32>
    %154 = tpu.matmul %152, %153, %cst_57 {dimension_numbers = #tpu.dot_dimension_numbers<[1], [0], [0], [1], [0, 0, 1, 1], [], []>} : vector<8x64xbf16>, vector<64x256xbf16>, vector<8x256xf32> -> vector<8x256xf32>
    %155 = arith.addf %151, %154 : vector<8x256xf32>
    %cst_58 = arith.constant 0.000000e+00 : f32
    %156 = vector.broadcast %cst_58 : f32 to vector<8x256xf32>
    %157 = arith.subf %156, %155 : vector<8x256xf32>
    %158 = math.exp %157 : vector<8x256xf32>
    %cst_59 = arith.constant 1.000000e+00 : f32
    %159 = vector.broadcast %cst_59 : f32 to vector<8x256xf32>
    %160 = arith.addf %159, %158 : vector<8x256xf32>
    %161 = tpu.reciprocal %160 {approx = true} : vector<8x256xf32> -> vector<8x256xf32>
    %162 = vector.extract_strided_slice %161 {offsets = [0, 0], sizes = [8, 64], strides = [1, 1]} : vector<8x256xf32> to vector<8x64xf32>
    %163 = vector.extract_strided_slice %161 {offsets = [0, 64], sizes = [8, 64], strides = [1, 1]} : vector<8x256xf32> to vector<8x64xf32>
    %164 = vector.extract_strided_slice %161 {offsets = [0, 192], sizes = [8, 64], strides = [1, 1]} : vector<8x256xf32> to vector<8x64xf32>
    %165 = vector.extract_strided_slice %155 {offsets = [0, 128], sizes = [8, 64], strides = [1, 1]} : vector<8x256xf32> to vector<8x64xf32>
    %166 = math.tanh %165 : vector<8x64xf32>
    %167 = arith.mulf %163, %146 : vector<8x64xf32>
    %168 = arith.mulf %162, %166 : vector<8x64xf32>
    %169 = arith.addf %167, %168 : vector<8x64xf32>
    %170 = math.tanh %169 : vector<8x64xf32>
    %171 = arith.mulf %164, %170 : vector<8x64xf32>
    %c7_i32 = arith.constant 7 : i32
    %172 = arith.index_cast %c7_i32 : i32 to index
    %c0_60 = arith.constant 0 : index
    %c0_61 = arith.constant 0 : index
    %173 = vector.load %arg9[%172, %c0_60, %c0_61] : memref<8x8x256xf32, #tpu.memory_space<vmem>>, vector<1x8x256xf32>
    %174 = vector.shape_cast %173 : vector<1x8x256xf32> to vector<8x256xf32>
    %175 = arith.truncf %171 : vector<8x64xf32> to vector<8x64xbf16>
    %c0_62 = arith.constant 0 : index
    %c0_63 = arith.constant 0 : index
    %176 = vector.load %arg2[%c0_62, %c0_63] : memref<64x256xbf16, #tpu.memory_space<vmem>>, vector<64x256xbf16>
    %cst_64 = arith.constant dense<0.000000e+00> : vector<8x256xf32>
    %177 = tpu.matmul %175, %176, %cst_64 {dimension_numbers = #tpu.dot_dimension_numbers<[1], [0], [0], [1], [0, 0, 1, 1], [], []>} : vector<8x64xbf16>, vector<64x256xbf16>, vector<8x256xf32> -> vector<8x256xf32>
    %178 = arith.addf %174, %177 : vector<8x256xf32>
    %cst_65 = arith.constant 0.000000e+00 : f32
    %179 = vector.broadcast %cst_65 : f32 to vector<8x256xf32>
    %180 = arith.subf %179, %178 : vector<8x256xf32>
    %181 = math.exp %180 : vector<8x256xf32>
    %cst_66 = arith.constant 1.000000e+00 : f32
    %182 = vector.broadcast %cst_66 : f32 to vector<8x256xf32>
    %183 = arith.addf %182, %181 : vector<8x256xf32>
    %184 = tpu.reciprocal %183 {approx = true} : vector<8x256xf32> -> vector<8x256xf32>
    %185 = vector.extract_strided_slice %184 {offsets = [0, 0], sizes = [8, 64], strides = [1, 1]} : vector<8x256xf32> to vector<8x64xf32>
    %186 = vector.extract_strided_slice %184 {offsets = [0, 64], sizes = [8, 64], strides = [1, 1]} : vector<8x256xf32> to vector<8x64xf32>
    %187 = vector.extract_strided_slice %184 {offsets = [0, 192], sizes = [8, 64], strides = [1, 1]} : vector<8x256xf32> to vector<8x64xf32>
    %188 = vector.extract_strided_slice %178 {offsets = [0, 128], sizes = [8, 64], strides = [1, 1]} : vector<8x256xf32> to vector<8x64xf32>
    %189 = math.tanh %188 : vector<8x64xf32>
    %190 = arith.mulf %186, %169 : vector<8x64xf32>
    %191 = arith.mulf %185, %189 : vector<8x64xf32>
    %192 = arith.addf %190, %191 : vector<8x64xf32>
    %193 = math.tanh %192 : vector<8x64xf32>
    %194 = arith.mulf %187, %193 : vector<8x64xf32>
    %c8_i32 = arith.constant 8 : i32
    %195 = arith.truncf %194 : vector<8x64xf32> to vector<8x64xbf16>
    %c0_67 = arith.constant 0 : index
    %c0_68 = arith.constant 0 : index
    %196 = vector.load %arg4[%c0_67, %c0_68] : memref<64x128xbf16, #tpu.memory_space<vmem>>, vector<64x128xbf16>
    %cst_69 = arith.constant dense<0.000000e+00> : vector<8x128xf32>
    %197 = tpu.matmul %195, %196, %cst_69 {dimension_numbers = #tpu.dot_dimension_numbers<[1], [0], [0], [1], [0, 0, 1, 1], [], []>} : vector<8x64xbf16>, vector<64x128xbf16>, vector<8x128xf32> -> vector<8x128xf32>
    %c0_70 = arith.constant 0 : index
    %c0_71 = arith.constant 0 : index
    %198 = vector.load %arg5[%c0_70, %c0_71] : memref<1x128xf32, #tpu.memory_space<vmem>>, vector<1x128xf32>
    %199 = vector.broadcast %198 : vector<1x128xf32> to vector<8x128xf32>
    %200 = arith.addf %197, %199 : vector<8x128xf32>
    %cst_72 = arith.constant 0.000000e+00 : f32
    %201 = vector.broadcast %cst_72 : f32 to vector<8x128xf32>
    %202 = arith.maximumf %200, %201 : vector<8x128xf32>
    %203 = arith.truncf %202 : vector<8x128xf32> to vector<8x128xbf16>
    %c0_73 = arith.constant 0 : index
    %c0_74 = arith.constant 0 : index
    %204 = vector.load %arg6[%c0_73, %c0_74] : memref<128x128xbf16, #tpu.memory_space<vmem>>, vector<128x128xbf16>
    %cst_75 = arith.constant dense<0.000000e+00> : vector<8x128xf32>
    %205 = tpu.matmul %203, %204, %cst_75 {dimension_numbers = #tpu.dot_dimension_numbers<[1], [0], [0], [1], [0, 0, 1, 1], [], []>} : vector<8x128xbf16>, vector<128x128xbf16>, vector<8x128xf32> -> vector<8x128xf32>
    %c0_76 = arith.constant 0 : index
    %c0_77 = arith.constant 0 : index
    %206 = vector.load %arg7[%c0_76, %c0_77] : memref<1x128xf32, #tpu.memory_space<vmem>>, vector<1x128xf32>
    %207 = vector.broadcast %206 : vector<1x128xf32> to vector<8x128xf32>
    %208 = arith.addf %205, %207 : vector<8x128xf32>
    %c0_78 = arith.constant 0 : index
    %c0_79 = arith.constant 0 : index
    %209 = vector.load %arg8[%c0_78, %c0_79] : memref<8x128xf32, #tpu.memory_space<vmem>>, vector<8x128xf32>
    tpu.vector_store %arg8[%c0_78, %c0_79], %208 {strides = array<i32>} : memref<8x128xf32, #tpu.memory_space<vmem>>, vector<8x128xf32>,
    return
  }
}

</mosaic_0001>

<llo_original>
// kernel: tpu_custom_call.1
$region0: #{tpu_custom_call.1}
  #allocation0 [shape = 'u32[]', space=smem, size = 0x4, offset = 0x4, fixed_abs, tag = 'smem constant byte address 0x4 - core index']
  #allocation1 [shape = 'u32[72,128]{1,0:T(1,128)}', space=vmem, size = 0x9000, scoped, tag = 'internal scratch']
  #allocation2 [shape = 'f32[8,8,256]{2,1,0:T(8,128)}', space=vmem, size = 0x10000, scoped, tag = 'scratch operand']
  %s0 = inlined_call_operand.hbm [shape: bf16[8,8,128], index: 0, kind: input, shape index: {}]
  %s1 = inlined_call_operand.hbm [shape: bf16[128,256], index: 1, kind: input, shape index: {}]
  %s2 = inlined_call_operand.hbm [shape: bf16[64,256], index: 2, kind: input, shape index: {}]
  %s3 = inlined_call_operand.vmem [shape: f32[1,256], index: 3, kind: input, shape index: {}]
  %s4 = inlined_call_operand.hbm [shape: bf16[64,128], index: 4, kind: input, shape index: {}]
  %s5 = inlined_call_operand.vmem [shape: f32[1,128], index: 5, kind: input, shape index: {}]
  %s6 = inlined_call_operand.hbm [shape: bf16[128,128], index: 6, kind: input, shape index: {}]
  %s7 = inlined_call_operand.vmem [shape: f32[1,128], index: 7, kind: input, shape index: {}]
  %s8 = inlined_call_operand.hbm [shape: f32[8,128], index: 8, kind: output, shape index: {}]
  %s9 = sld [smem:[#allocation0]]
  $region62: #{tpu_custom_call.1} parent=0
    _
  %s11 = ssub.s32 1, %s9
  %s12 = scalar_select 0, %s11, %s9
  $region1: #{tpu_custom_call.1} parent=0
    #allocation3 [shape = 'u8[16384]{0}', space=vmem, size = 0x4000, scoped, tag = 'input window, operand 0, single buffered']
    #allocation4 [shape = 's32[1]{0}', space=sflag, size = 0x4, scoped, tag = 'scoped memory for tpu_custom_call.1']
    #allocation5 [shape = 's32[1]{0}', space=sflag, size = 0x4, scoped, tag = 'scoped memory for tpu_custom_call.1']
    #allocation6 [shape = 'u8[65536]{0}', space=vmem, size = 0x10000, scoped, tag = 'input window, operand 1, single buffered']
    #allocation7 [shape = 's32[1]{0}', space=sflag, size = 0x4, scoped, tag = 'scoped memory for tpu_custom_call.1']
    #allocation8 [shape = 'u8[32768]{0}', space=vmem, size = 0x8000, scoped, tag = 'input window, operand 2, single buffered']
    #allocation9 [shape = 'u8[16384]{0}', space=vmem, size = 0x4000, scoped, tag = 'input window, operand 4, single buffered']
    #allocation10 [shape = 's32[1]{0}', space=sflag, size = 0x4, scoped, tag = 'scoped memory for tpu_custom_call.1']
    #allocation11 [shape = 'u8[32768]{0}', space=vmem, size = 0x8000, scoped, tag = 'input window, operand 6, single buffered']
    #allocation12 [shape = 'u8[4096]{0}', space=vmem, size = 0x1000, scoped, tag = 'output window, operand 0, single buffered']
    %13 = vsyncpa [#allocation4], 0
    %14 = vsyncpa [#allocation7], 0
    %15 = vsyncpa [#allocation10], 0
    %16 = vsyncpa [#allocation5], 0
    // Predicated region
    $region2: #{tpu_custom_call.1} parent=1 // pred_check
      _
    $region3: #{tpu_custom_call.1} parent=1 // pred_check_branch
      %18 = sbr.rel (0) target = $region5
    $region4: #{tpu_custom_call.1} parent=1 // pred_region
      %20 = vsyncadd [#allocation4], 0
      %s21 = sshll.u32 %s0, 4
      %s22 = int_to_ptr.hbm [resolvable:$true] %s21
      %s23 = sshll.u32 [#allocation3], 4
      %s24 = int_to_ptr.vmem [resolvable:$true] %s23
      %29 = dma.hbm_to_vmem [thread:$0]  %s22, 512, %s24, [#allocation4], 64, 64, 4
    $region5: #{tpu_custom_call.1} parent=1 // pred_fallthru
      _
    // Predicated region
    $region6: #{tpu_custom_call.1} parent=1 // pred_check
      _
    $region7: #{tpu_custom_call.1} parent=1 // pred_check_branch
      %31 = sbr.rel (0) target = $region9
    $region8: #{tpu_custom_call.1} parent=1 // pred_region
      %33 = vsyncadd [#allocation7], 0
      %s34 = sshll.u32 %s1, 4
      %s35 = int_to_ptr.hbm [resolvable:$true] %s34
      %s36 = sshll.u32 [#allocation6], 4
      %s37 = int_to_ptr.vmem [resolvable:$true] %s36
      %42 = dma.hbm_to_vmem [thread:$0]  %s35, 2048, %s37, [#allocation7], 128, 128, 8
    $region9: #{tpu_custom_call.1} parent=1 // pred_fallthru
      _
    // Predicated region
    $region10: #{tpu_custom_call.1} parent=1 // pred_check
      _
    $region11: #{tpu_custom_call.1} parent=1 // pred_check_branch
      %44 = sbr.rel (0) target = $region13
    $region12: #{tpu_custom_call.1} parent=1 // pred_region
      %46 = vsyncadd [#allocation7], 0
      %s47 = sshll.u32 %s2, 4
      %s48 = int_to_ptr.hbm [resolvable:$true] %s47
      %s49 = sshll.u32 [#allocation8], 4
      %s50 = int_to_ptr.vmem [resolvable:$true] %s49
      %55 = dma.hbm_to_vmem [thread:$0]  %s48, 1024, %s50, [#allocation7], 128, 128, 8
    $region13: #{tpu_custom_call.1} parent=1 // pred_fallthru
      _
    // Predicated region
    $region14: #{tpu_custom_call.1} parent=1 // pred_check
      _
    $region15: #{tpu_custom_call.1} parent=1 // pred_check_branch
      %57 = sbr.rel (0) target = $region17
    $region16: #{tpu_custom_call.1} parent=1 // pred_region
      _
    $region17: #{tpu_custom_call.1} parent=1 // pred_fallthru
      _
    // Predicated region
    $region18: #{tpu_custom_call.1} parent=1 // pred_check
      _
    $region19: #{tpu_custom_call.1} parent=1 // pred_check_branch
      %59 = sbr.rel (0) target = $region21
    $region20: #{tpu_custom_call.1} parent=1 // pred_region
      %61 = vsyncadd [#allocation10], 0
      %s62 = sshll.u32 %s4, 4
      %s63 = int_to_ptr.hbm [resolvable:$true] %s62
      %s64 = sshll.u32 [#allocation9], 4
      %s65 = int_to_ptr.vmem [resolvable:$true] %s64
      %70 = dma.hbm_to_vmem [thread:$0]  %s63, 512, %s65, [#allocation10], 64, 64, 4
    $region21: #{tpu_custom_call.1} parent=1 // pred_fallthru
      _
    // Predicated region
    $region22: #{tpu_custom_call.1} parent=1 // pred_check
      _
    $region23: #{tpu_custom_call.1} parent=1 // pred_check_branch
      %72 = sbr.rel (0) target = $region25
    $region24: #{tpu_custom_call.1} parent=1 // pred_region
      _
    $region25: #{tpu_custom_call.1} parent=1 // pred_fallthru
      _
    // Predicated region
    $region26: #{tpu_custom_call.1} parent=1 // pred_check
      _
    $region27: #{tpu_custom_call.1} parent=1 // pred_check_branch
      %74 = sbr.rel (0) target = $region29
    $region28: #{tpu_custom_call.1} parent=1 // pred_region
      %76 = vsyncadd [#allocation10], 0
      %s77 = sshll.u32 %s6, 4
      %s78 = int_to_ptr.hbm [resolvable:$true] %s77
      %s79 = sshll.u32 [#allocation11], 4
      %s80 = int_to_ptr.vmem [resolvable:$true] %s79
      %85 = dma.hbm_to_vmem [thread:$0]  %s78, 1024, %s80, [#allocation10], 64, 64, 4
    $region29: #{tpu_custom_call.1} parent=1 // pred_fallthru
      _
    // Predicated region
    $region30: #{tpu_custom_call.1} parent=1 // pred_check
      _
    $region31: #{tpu_custom_call.1} parent=1 // pred_check_branch
      %87 = sbr.rel (0) target = $region33
    $region32: #{tpu_custom_call.1} parent=1 // pred_region
      _
    $region33: #{tpu_custom_call.1} parent=1 // pred_fallthru
      _
    // Predicated region
    $region34: #{tpu_custom_call.1} parent=1 // pred_check
      _
    $region35: #{tpu_custom_call.1} parent=1 // pred_check_branch
      %89 = sbr.rel (0) target = $region37
    $region36: #{tpu_custom_call.1} parent=1 // pred_region
      %91 = dma.done [#allocation4], 512
    $region37: #{tpu_custom_call.1} parent=1 // pred_fallthru
      _
    // Predicated region
    $region38: #{tpu_custom_call.1} parent=1 // pred_check
      _
    $region39: #{tpu_custom_call.1} parent=1 // pred_check_branch
      %93 = sbr.rel (0) target = $region41
    $region40: #{tpu_custom_call.1} parent=1 // pred_region
      %95 = dma.done [#allocation7], 2048
    $region41: #{tpu_custom_call.1} parent=1 // pred_fallthru
      _
    // Predicated region
    $region42: #{tpu_custom_call.1} parent=1 // pred_check
      _
    $region43: #{tpu_custom_call.1} parent=1 // pred_check_branch
      %97 = sbr.rel (0) target = $region45
    $region44: #{tpu_custom_call.1} parent=1 // pred_region
      %99 = dma.done [#allocation7], 1024
    $region45: #{tpu_custom_call.1} parent=1 // pred_fallthru
      _
    // Predicated region
    $region46: #{tpu_custom_call.1} parent=1 // pred_check
      _
    $region47: #{tpu_custom_call.1} parent=1 // pred_check_branch
      %101 = sbr.rel (0) target = $region49
    $region48: #{tpu_custom_call.1} parent=1 // pred_region
      %103 = dma.done [#allocation10], 512
    $region49: #{tpu_custom_call.1} parent=1 // pred_fallthru
      _
    // Predicated region
    $region50: #{tpu_custom_call.1} parent=1 // pred_check
      _
    $region51: #{tpu_custom_call.1} parent=1 // pred_check_branch
      %105 = sbr.rel (0) target = $region53
    $region52: #{tpu_custom_call.1} parent=1 // pred_region
      %107 = dma.done [#allocation10], 1024
    $region53: #{tpu_custom_call.1} parent=1 // pred_fallthru
      _
    %v109 = vld [vmem:[#allocation3] sm:$0xf]
    %v110 = vld [vmem:[#allocation3 + $0x4] sm:$0xf]
    %v111 = vld [vmem:[#allocation3 + $0x8] sm:$0xf]
    %v112 = vld [vmem:[#allocation3 + $0xc] sm:$0xf]
    %v113 = vld [vmem:[#allocation3 + $0x10] sm:$0xf]
    %v114 = vld [vmem:[#allocation3 + $0x14] sm:$0xf]
    %v115 = vld [vmem:[#allocation3 + $0x18] sm:$0xf]
    %v116 = vld [vmem:[#allocation3 + $0x1c] sm:$0xf]
    %v117 = vld [vmem:[#allocation6] sm:$0xff]
    %v118 = vld [vmem:[#allocation6 + $0x8] sm:$0xff]
    %v119 = vld [vmem:[#allocation6 + $0x10] sm:$0xff]
    %v120 = vld [vmem:[#allocation6 + $0x18] sm:$0xff]
    %v121 = vld [vmem:[#allocation6 + $0x20] sm:$0xff]
    %v122 = vld [vmem:[#allocation6 + $0x28] sm:$0xff]
    %v123 = vld [vmem:[#allocation6 + $0x30] sm:$0xff]
    %v124 = vld [vmem:[#allocation6 + $0x38] sm:$0xff]
    %v125 = vld [vmem:[#allocation6 + $0x40] sm:$0xff]
    %v126 = vld [vmem:[#allocation6 + $0x48] sm:$0xff]
    %v127 = vld [vmem:[#allocation6 + $0x50] sm:$0xff]
    %v128 = vld [vmem:[#allocation6 + $0x58] sm:$0xff]
    %v129 = vld [vmem:[#allocation6 + $0x60] sm:$0xff]
    %v130 = vld [vmem:[#allocation6 + $0x68] sm:$0xff]
    %v131 = vld [vmem:[#allocation6 + $0x70] sm:$0xff]
    %v132 = vld [vmem:[#allocation6 + $0x78] sm:$0xff]
    %v133 = vld [vmem:[%s3] sm:$0x3]
    %v135 = vperm.slane %v133, 0
    %v136 = vperm.slane %v133, 1
    %v147 = vunpack.c.l.b16 %v109
    %v148 = vunpack.c.l.b16 %v110
    %v149 = vunpack.c.l.b16 %v111
    %v150 = vunpack.c.l.b16 %v112
    %v151 = vunpack.c.l.b16 %v113
    %v152 = vunpack.c.l.b16 %v114
    %v153 = vunpack.c.l.b16 %v115
    %v154 = vunpack.c.l.b16 %v116
    %v155 = vpack.c.b16 %v148, %v147
    %v156 = vpack.c.b16 %v150, %v149
    %v157 = vpack.c.b16 %v152, %v151
    %v158 = vpack.c.b16 %v154, %v153
    %v179 = vunpack.c.l.b16 %v117
    %v180 = vunpack.c.h.b16 %v117
    %v181 = vunpack.c.l.b16 %v118
    %v182 = vunpack.c.h.b16 %v118
    %v183 = vunpack.c.l.b16 %v119
    %v184 = vunpack.c.h.b16 %v119
    %v185 = vunpack.c.l.b16 %v120
    %v186 = vunpack.c.h.b16 %v120
    %v187 = vunpack.c.l.b16 %v121
    %v188 = vunpack.c.h.b16 %v121
    %v189 = vunpack.c.l.b16 %v122
    %v190 = vunpack.c.h.b16 %v122
    %v191 = vunpack.c.l.b16 %v123
    %v192 = vunpack.c.h.b16 %v123
    %v193 = vunpack.c.l.b16 %v124
    %v194 = vunpack.c.h.b16 %v124
    %v195 = vunpack.c.l.b16 %v125
    %v196 = vunpack.c.h.b16 %v125
    %v197 = vunpack.c.l.b16 %v126
    %v198 = vunpack.c.h.b16 %v126
    %v199 = vunpack.c.l.b16 %v127
    %v200 = vunpack.c.h.b16 %v127
    %v201 = vunpack.c.l.b16 %v128
    %v202 = vunpack.c.h.b16 %v128
    %v203 = vunpack.c.l.b16 %v129
    %v204 = vunpack.c.h.b16 %v129
    %v205 = vunpack.c.l.b16 %v130
    %v206 = vunpack.c.h.b16 %v130
    %v207 = vunpack.c.l.b16 %v131
    %v208 = vunpack.c.h.b16 %v131
    %v209 = vunpack.c.l.b16 %v132
    %v210 = vunpack.c.h.b16 %v132
    %v211 = vpack.c.b16 %v181, %v179
    %v212 = vpack.c.b16 %v182, %v180
    %v213 = vpack.c.b16 %v185, %v183
    %v214 = vpack.c.b16 %v186, %v184
    %v215 = vpack.c.b16 %v189, %v187
    %v216 = vpack.c.b16 %v190, %v188
    %v217 = vpack.c.b16 %v193, %v191
    %v218 = vpack.c.b16 %v194, %v192
    %v219 = vpack.c.b16 %v197, %v195
    %v220 = vpack.c.b16 %v198, %v196
    %v221 = vpack.c.b16 %v201, %v199
    %v222 = vpack.c.b16 %v202, %v200
    %v223 = vpack.c.b16 %v205, %v203
    %v224 = vpack.c.b16 %v206, %v204
    %v225 = vpack.c.b16 %v209, %v207
    %v226 = vpack.c.b16 %v210, %v208
    %243 = vmatpush.bf16.msra.mxu0 %v225
    %244 = vmatpush.bf16.msra.mxu0 %v223
    %245 = vmatpush.bf16.msra.mxu0 %v221
    %246 = vmatpush.bf16.msra.mxu0 %v219
    %247 = vmatpush.bf16.msra.mxu0 %v217
    %248 = vmatpush.bf16.msra.mxu0 %v215
    %249 = vmatpush.bf16.msra.mxu0 %v213
    %250 = vmatpush.bf16.msra.mxu0 %v211
    %251 = vmatmul.bf16.gmra.mxu0 %v155
    %v252 = vpop.f32.mrf.mxu0
    %v253 = vadd.f32 %v135, %v252
    %v254 = vpop.f32.mrf.mxu0
    %v255 = vadd.f32 %v135, %v254
    %256 = vmatmul.bf16.gmra.mxu0 %v156
    %v257 = vpop.f32.mrf.mxu0
    %v258 = vadd.f32 %v135, %v257
    %v259 = vpop.f32.mrf.mxu0
    %v260 = vadd.f32 %v135, %v259
    %261 = vmatmul.bf16.gmra.mxu0 %v157
    %v262 = vpop.f32.mrf.mxu0
    %v263 = vadd.f32 %v135, %v262
    %v264 = vpop.f32.mrf.mxu0
    %v265 = vadd.f32 %v135, %v264
    %266 = vmatmul.bf16.gmra.mxu0 %v158
    %v267 = vpop.f32.mrf.mxu0
    %v268 = vadd.f32 %v135, %v267
    %v269 = vpop.f32.mrf.mxu0
    %v270 = vadd.f32 %v135, %v269
    %271 = vdwg.mxu0
    %272 = vmatpush.bf16.msra.mxu0 %v226
    %273 = vmatpush.bf16.msra.mxu0 %v224
    %274 = vmatpush.bf16.msra.mxu0 %v222
    %275 = vmatpush.bf16.msra.mxu0 %v220
    %276 = vmatpush.bf16.msra.mxu0 %v218
    %277 = vmatpush.bf16.msra.mxu0 %v216
    %278 = vmatpush.bf16.msra.mxu0 %v214
    %279 = vmatpush.bf16.msra.mxu0 %v212
    %280 = vmatmul.bf16.gmra.mxu0 %v155
    %v281 = vpop.f32.mrf.mxu0
    %v282 = vadd.f32 %v136, %v281
    %v283 = vpop.f32.mrf.mxu0
    %v284 = vadd.f32 %v136, %v283
    %285 = vmatmul.bf16.gmra.mxu0 %v156
    %v286 = vpop.f32.mrf.mxu0
    %v287 = vadd.f32 %v136, %v286
    %v288 = vpop.f32.mrf.mxu0
    %v289 = vadd.f32 %v136, %v288
    %290 = vmatmul.bf16.gmra.mxu0 %v157
    %v291 = vpop.f32.mrf.mxu0
    %v292 = vadd.f32 %v136, %v291
    %v293 = vpop.f32.mrf.mxu0
    %v294 = vadd.f32 %v136, %v293
    %295 = vmatmul.bf16.gmra.mxu0 %v158
    %v296 = vpop.f32.mrf.mxu0
    %v297 = vadd.f32 %v136, %v296
    %v298 = vpop.f32.mrf.mxu0
    %v299 = vadd.f32 %v136, %v298
    %300 = vdwg.mxu0
    %301 = vst [vmem:[#allocation2] sm:$0xff] %v253
    %302 = vst [vmem:[#allocation2 + $0x8] sm:$0xff] %v282
    %303 = vst [vmem:[#allocation2 + $0x10] sm:$0xff] %v255
    %304 = vst [vmem:[#allocation2 + $0x18] sm:$0xff] %v284
    %305 = vst [vmem:[#allocation2 + $0x20] sm:$0xff] %v258
    %306 = vst [vmem:[#allocation2 + $0x28] sm:$0xff] %v287
    %307 = vst [vmem:[#allocation2 + $0x30] sm:$0xff] %v260
    %308 = vst [vmem:[#allocation2 + $0x38] sm:$0xff] %v289
    %309 = vst [vmem:[#allocation2 + $0x40] sm:$0xff] %v263
    %310 = vst [vmem:[#allocation2 + $0x48] sm:$0xff] %v292
    %311 = vst [vmem:[#allocation2 + $0x50] sm:$0xff] %v265
    %312 = vst [vmem:[#allocation2 + $0x58] sm:$0xff] %v294
    %313 = vst [vmem:[#allocation2 + $0x60] sm:$0xff] %v268
    %314 = vst [vmem:[#allocation2 + $0x68] sm:$0xff] %v297
    %315 = vst [vmem:[#allocation2 + $0x70] sm:$0xff] %v270
    %316 = vst [vmem:[#allocation2 + $0x78] sm:$0xff] %v299
    %v317 = vld [vmem:[#allocation2] sm:$0xff]
    %v318 = vld [vmem:[#allocation2 + $0x8] sm:$0xff]
    %v319 = vld [vmem:[#allocation8] sm:$0xff]
    %v320 = vld [vmem:[#allocation8 + $0x8] sm:$0xff]
    %v321 = vld [vmem:[#allocation8 + $0x10] sm:$0xff]
    %v322 = vld [vmem:[#allocation8 + $0x18] sm:$0xff]
    %v323 = vld [vmem:[#allocation8 + $0x20] sm:$0xff]
    %v324 = vld [vmem:[#allocation8 + $0x28] sm:$0xff]
    %v325 = vld [vmem:[#allocation8 + $0x30] sm:$0xff]
    %v326 = vld [vmem:[#allocation8 + $0x38] sm:$0xff]
    %v335 = vunpack.c.l.b16 %v319
    %v336 = vunpack.c.h.b16 %v319
    %v337 = vunpack.c.l.b16 %v320
    %v338 = vunpack.c.h.b16 %v320
    %v339 = vunpack.c.l.b16 %v321
    %v340 = vunpack.c.h.b16 %v321
    %v341 = vunpack.c.l.b16 %v322
    %v342 = vunpack.c.h.b16 %v322
    %v343 = vunpack.c.l.b16 %v323
    %v344 = vunpack.c.h.b16 %v323
    %v345 = vunpack.c.l.b16 %v324
    %v346 = vunpack.c.h.b16 %v324
    %v347 = vunpack.c.l.b16 %v325
    %v348 = vunpack.c.h.b16 %v325
    %v349 = vunpack.c.l.b16 %v326
    %v350 = vunpack.c.h.b16 %v326
    %v351 = vpack.c.b16 %v337, %v335
    %v352 = vpack.c.b16 %v338, %v336
    %v353 = vpack.c.b16 %v341, %v339
    %v354 = vpack.c.b16 %v342, %v340
    %v355 = vpack.c.b16 %v345, %v343
    %v356 = vpack.c.b16 %v346, %v344
    %v357 = vpack.c.b16 %v349, %v347
    %v358 = vpack.c.b16 %v350, %v348
    %vm367 = vcmask 523264
    %v369 = vsel %vm367, 0, 0
    %371 = vmatpush.bf16.msra.mxu0 0
    %372 = vmatpush.bf16.msra.mxu0 0
    %373 = vmatpush.bf16.msra.mxu0 0
    %374 = vmatpush.bf16.msra.mxu0 0
    %375 = vmatpush.bf16.msra.mxu0 %v357
    %376 = vmatpush.bf16.msra.mxu0 %v355
    %377 = vmatpush.bf16.msra.mxu0 %v353
    %378 = vmatpush.bf16.msra.mxu0 %v351
    %379 = vmatmul.bf16.gmra.mxu0 %v369
    %v380 = vpop.f32.mrf.mxu0
    %v381 = vadd.f32 0.0, %v380
    %v382 = vpop.f32.mrf.mxu0
    %383 = vdwg.mxu0
    %384 = vmatpush.bf16.msra.mxu0 0
    %385 = vmatpush.bf16.msra.mxu0 0
    %386 = vmatpush.bf16.msra.mxu0 0
    %387 = vmatpush.bf16.msra.mxu0 0
    %388 = vmatpush.bf16.msra.mxu0 %v358
    %389 = vmatpush.bf16.msra.mxu0 %v356
    %390 = vmatpush.bf16.msra.mxu0 %v354
    %391 = vmatpush.bf16.msra.mxu0 %v352
    %392 = vmatmul.bf16.gmra.mxu0 %v369
    %v393 = vpop.f32.mrf.mxu0
    %v394 = vadd.f32 0.0, %v393
    %v395 = vpop.f32.mrf.mxu0
    %396 = vdwg.mxu0
    %v397 = vadd.f32 %v317, %v381
    %v398 = vadd.f32 %v318, %v394
    %v399 = vsub.f32 0.0, %v397
    %v400 = vsub.f32 0.0, %v398
    %v401 = vmul.f32 %v399, 1.442695
    %v402 = vpow.pop %v401
    %v403 = vmul.f32 %v400, 1.442695
    %v404 = vpow.pop %v403
    %v405 = vadd.f32 %v402, 1.0
    %v406 = vadd.f32 %v404, 1.0
    %v407 = vrcp.pop %v405
    %v408 = vrcp.pop %v406
    %v409 = vtanh.pop %v398
    %v410 = vmul.f32 %v407, 0.0
    %v411 = vmul.f32 %v407, %v409
    %413 = vrot.lane.b32.xlu0 %v411, 64
    %v414 = vpop.permute.xlu0 %413
    %v416 = vadd.f32 %v410, %v414
    %v417 = vtanh.pop %v416
    %v418 = vmul.f32 %v408, %v417
    %s419 = scalar_lea.vmem [#allocation2], 16
    %v420 = vld [vmem:[%s419] sm:$0xff]
    %v421 = vld [vmem:[%s419 + $0x8] sm:$0xff]
    %v422 = vpack.c.bf16 %v418, %v418
    %424 = vrot.lane.b32.xlu0 %v422, 64
    %v425 = vpop.permute.xlu0 %424
    %v427 = vsel %vm367, %v425, 0
    %429 = vmatpush.bf16.msra.mxu0 0
    %430 = vmatpush.bf16.msra.mxu0 0
    %431 = vmatpush.bf16.msra.mxu0 0
    %432 = vmatpush.bf16.msra.mxu0 0
    %433 = vmatpush.bf16.msra.mxu0 %v357
    %434 = vmatpush.bf16.msra.mxu0 %v355
    %435 = vmatpush.bf16.msra.mxu0 %v353
    %436 = vmatpush.bf16.msra.mxu0 %v351
    %437 = vmatmul.bf16.gmra.mxu0 %v427
    %v438 = vpop.f32.mrf.mxu0
    %v439 = vadd.f32 0.0, %v438
    %v440 = vpop.f32.mrf.mxu0
    %441 = vdwg.mxu0
    %442 = vmatpush.bf16.msra.mxu0 0
    %443 = vmatpush.bf16.msra.mxu0 0
    %444 = vmatpush.bf16.msra.mxu0 0
    %445 = vmatpush.bf16.msra.mxu0 0
    %446 = vmatpush.bf16.msra.mxu0 %v358
    %447 = vmatpush.bf16.msra.mxu0 %v356
    %448 = vmatpush.bf16.msra.mxu0 %v354
    %449 = vmatpush.bf16.msra.mxu0 %v352
    %450 = vmatmul.bf16.gmra.mxu0 %v427
    %v451 = vpop.f32.mrf.mxu0
    %v452 = vadd.f32 0.0, %v451
    %v453 = vpop.f32.mrf.mxu0
    %454 = vdwg.mxu0
    %v455 = vadd.f32 %v420, %v439
    %v456 = vadd.f32 %v421, %v452
    %v457 = vsub.f32 0.0, %v455
    %v458 = vsub.f32 0.0, %v456
    %v459 = vmul.f32 %v457, 1.442695
    %v460 = vpow.pop %v459
    %v461 = vmul.f32 %v458, 1.442695
    %v462 = vpow.pop %v461
    %v463 = vadd.f32 %v460, 1.0
    %v464 = vadd.f32 %v462, 1.0
    %v465 = vrcp.pop %v463
    %v466 = vrcp.pop %v464
    %v467 = vtanh.pop %v456
    %v468 = vmul.f32 %v465, %v416
    %v469 = vmul.f32 %v465, %v467
    %471 = vrot.lane.b32.xlu0 %v469, 64
    %v472 = vpop.permute.xlu0 %471
    %v474 = vadd.f32 %v468, %v472
    %v475 = vtanh.pop %v474
    %v476 = vmul.f32 %v466, %v475
    %s477 = scalar_lea.vmem [#allocation2], 32
    %v478 = vld [vmem:[%s477] sm:$0xff]
    %v479 = vld [vmem:[%s477 + $0x8] sm:$0xff]
    %v480 = vpack.c.bf16 %v476, %v476
    %482 = vrot.lane.b32.xlu0 %v480, 64
    %v483 = vpop.permute.xlu0 %482
    %v485 = vsel %vm367, %v483, 0
    %487 = vmatpush.bf16.msra.mxu0 0
    %488 = vmatpush.bf16.msra.mxu0 0
    %489 = vmatpush.bf16.msra.mxu0 0
    %490 = vmatpush.bf16.msra.mxu0 0
    %491 = vmatpush.bf16.msra.mxu0 %v357
    %492 = vmatpush.bf16.msra.mxu0 %v355
    %493 = vmatpush.bf16.msra.mxu0 %v353
    %494 = vmatpush.bf16.msra.mxu0 %v351
    %495 = vmatmul.bf16.gmra.mxu0 %v485
    %v496 = vpop.f32.mrf.mxu0
    %v497 = vadd.f32 0.0, %v496
    %v498 = vpop.f32.mrf.mxu0
    %499 = vdwg.mxu0
    %500 = vmatpush.bf16.msra.mxu0 0
    %501 = vmatpush.bf16.msra.mxu0 0
    %502 = vmatpush.bf16.msra.mxu0 0
    %503 = vmatpush.bf16.msra.mxu0 0
    %504 = vmatpush.bf16.msra.mxu0 %v358
    %505 = vmatpush.bf16.msra.mxu0 %v356
    %506 = vmatpush.bf16.msra.mxu0 %v354
    %507 = vmatpush.bf16.msra.mxu0 %v352
    %508 = vmatmul.bf16.gmra.mxu0 %v485
    %v509 = vpop.f32.mrf.mxu0
    %v510 = vadd.f32 0.0, %v509
    %v511 = vpop.f32.mrf.mxu0
    %512 = vdwg.mxu0
    %v513 = vadd.f32 %v478, %v497
    %v514 = vadd.f32 %v479, %v510
    %v515 = vsub.f32 0.0, %v513
    %v516 = vsub.f32 0.0, %v514
    %v517 = vmul.f32 %v515, 1.442695
    %v518 = vpow.pop %v517
    %v519 = vmul.f32 %v516, 1.442695
    %v520 = vpow.pop %v519
    %v521 = vadd.f32 %v518, 1.0
    %v522 = vadd.f32 %v520, 1.0
    %v523 = vrcp.pop %v521
    %v524 = vrcp.pop %v522
    %v525 = vtanh.pop %v514
    %v526 = vmul.f32 %v523, %v474
    %v527 = vmul.f32 %v523, %v525
    %529 = vrot.lane.b32.xlu0 %v527, 64
    %v530 = vpop.permute.xlu0 %529
    %v532 = vadd.f32 %v526, %v530
    %v533 = vtanh.pop %v532
    %v534 = vmul.f32 %v524, %v533
    %s535 = scalar_lea.vmem [#allocation2], 48
    %v536 = vld [vmem:[%s535] sm:$0xff]
    %v537 = vld [vmem:[%s535 + $0x8] sm:$0xff]
    %v538 = vpack.c.bf16 %v534, %v534
    %540 = vrot.lane.b32.xlu0 %v538, 64
    %v541 = vpop.permute.xlu0 %540
    %v543 = vsel %vm367, %v541, 0
    %545 = vmatpush.bf16.msra.mxu0 0
    %546 = vmatpush.bf16.msra.mxu0 0
    %547 = vmatpush.bf16.msra.mxu0 0
    %548 = vmatpush.bf16.msra.mxu0 0
    %549 = vmatpush.bf16.msra.mxu0 %v357
    %550 = vmatpush.bf16.msra.mxu0 %v355
    %551 = vmatpush.bf16.msra.mxu0 %v353
    %552 = vmatpush.bf16.msra.mxu0 %v351
    %553 = vmatmul.bf16.gmra.mxu0 %v543
    %v554 = vpop.f32.mrf.mxu0
    %v555 = vadd.f32 0.0, %v554
    %v556 = vpop.f32.mrf.mxu0
    %557 = vdwg.mxu0
    %558 = vmatpush.bf16.msra.mxu0 0
    %559 = vmatpush.bf16.msra.mxu0 0
    %560 = vmatpush.bf16.msra.mxu0 0
    %561 = vmatpush.bf16.msra.mxu0 0
    %562 = vmatpush.bf16.msra.mxu0 %v358
    %563 = vmatpush.bf16.msra.mxu0 %v356
    %564 = vmatpush.bf16.msra.mxu0 %v354
    %565 = vmatpush.bf16.msra.mxu0 %v352
    %566 = vmatmul.bf16.gmra.mxu0 %v543
    %v567 = vpop.f32.mrf.mxu0
    %v568 = vadd.f32 0.0, %v567
    %v569 = vpop.f32.mrf.mxu0
    %570 = vdwg.mxu0
    %v571 = vadd.f32 %v536, %v555
    %v572 = vadd.f32 %v537, %v568
    %v573 = vsub.f32 0.0, %v571
    %v574 = vsub.f32 0.0, %v572
    %v575 = vmul.f32 %v573, 1.442695
    %v576 = vpow.pop %v575
    %v577 = vmul.f32 %v574, 1.442695
    %v578 = vpow.pop %v577
    %v579 = vadd.f32 %v576, 1.0
    %v580 = vadd.f32 %v578, 1.0
    %v581 = vrcp.pop %v579
    %v582 = vrcp.pop %v580
    %v583 = vtanh.pop %v572
    %v584 = vmul.f32 %v581, %v532
    %v585 = vmul.f32 %v581, %v583
    %587 = vrot.lane.b32.xlu0 %v585, 64
    %v588 = vpop.permute.xlu0 %587
    %v590 = vadd.f32 %v584, %v588
    %v591 = vtanh.pop %v590
    %v592 = vmul.f32 %v582, %v591
    %s593 = scalar_lea.vmem [#allocation2], 64
    %v594 = vld [vmem:[%s593] sm:$0xff]
    %v595 = vld [vmem:[%s593 + $0x8] sm:$0xff]
    %v596 = vpack.c.bf16 %v592, %v592
    %598 = vrot.lane.b32.xlu0 %v596, 64
    %v599 = vpop.permute.xlu0 %598
    %v601 = vsel %vm367, %v599, 0
    %603 = vmatpush.bf16.msra.mxu0 0
    %604 = vmatpush.bf16.msra.mxu0 0
    %605 = vmatpush.bf16.msra.mxu0 0
    %606 = vmatpush.bf16.msra.mxu0 0
    %607 = vmatpush.bf16.msra.mxu0 %v357
    %608 = vmatpush.bf16.msra.mxu0 %v355
    %609 = vmatpush.bf16.msra.mxu0 %v353
    %610 = vmatpush.bf16.msra.mxu0 %v351
    %611 = vmatmul.bf16.gmra.mxu0 %v601
    %v612 = vpop.f32.mrf.mxu0
    %v613 = vadd.f32 0.0, %v612
    %v614 = vpop.f32.mrf.mxu0
    %615 = vdwg.mxu0
    %616 = vmatpush.bf16.msra.mxu0 0
    %617 = vmatpush.bf16.msra.mxu0 0
    %618 = vmatpush.bf16.msra.mxu0 0
    %619 = vmatpush.bf16.msra.mxu0 0
    %620 = vmatpush.bf16.msra.mxu0 %v358
    %621 = vmatpush.bf16.msra.mxu0 %v356
    %622 = vmatpush.bf16.msra.mxu0 %v354
    %623 = vmatpush.bf16.msra.mxu0 %v352
    %624 = vmatmul.bf16.gmra.mxu0 %v601
    %v625 = vpop.f32.mrf.mxu0
    %v626 = vadd.f32 0.0, %v625
    %v627 = vpop.f32.mrf.mxu0
    %628 = vdwg.mxu0
    %v629 = vadd.f32 %v594, %v613
    %v630 = vadd.f32 %v595, %v626
    %v631 = vsub.f32 0.0, %v629
    %v632 = vsub.f32 0.0, %v630
    %v633 = vmul.f32 %v631, 1.442695
    %v634 = vpow.pop %v633
    %v635 = vmul.f32 %v632, 1.442695
    %v636 = vpow.pop %v635
    %v637 = vadd.f32 %v634, 1.0
    %v638 = vadd.f32 %v636, 1.0
    %v639 = vrcp.pop %v637
    %v640 = vrcp.pop %v638
    %v641 = vtanh.pop %v630
    %v642 = vmul.f32 %v639, %v590
    %v643 = vmul.f32 %v639, %v641
    %645 = vrot.lane.b32.xlu0 %v643, 64
    %v646 = vpop.permute.xlu0 %645
    %v648 = vadd.f32 %v642, %v646
    %v649 = vtanh.pop %v648
    %v650 = vmul.f32 %v640, %v649
    %s651 = scalar_lea.vmem [#allocation2], 80
    %v652 = vld [vmem:[%s651] sm:$0xff]
    %v653 = vld [vmem:[%s651 + $0x8] sm:$0xff]
    %v654 = vpack.c.bf16 %v650, %v650
    %656 = vrot.lane.b32.xlu0 %v654, 64
    %v657 = vpop.permute.xlu0 %656
    %v659 = vsel %vm367, %v657, 0
    %661 = vmatpush.bf16.msra.mxu0 0
    %662 = vmatpush.bf16.msra.mxu0 0
    %663 = vmatpush.bf16.msra.mxu0 0
    %664 = vmatpush.bf16.msra.mxu0 0
    %665 = vmatpush.bf16.msra.mxu0 %v357
    %666 = vmatpush.bf16.msra.mxu0 %v355
    %667 = vmatpush.bf16.msra.mxu0 %v353
    %668 = vmatpush.bf16.msra.mxu0 %v351
    %669 = vmatmul.bf16.gmra.mxu0 %v659
    %v670 = vpop.f32.mrf.mxu0
    %v671 = vadd.f32 0.0, %v670
    %v672 = vpop.f32.mrf.mxu0
    %673 = vdwg.mxu0
    %674 = vmatpush.bf16.msra.mxu0 0
    %675 = vmatpush.bf16.msra.mxu0 0
    %676 = vmatpush.bf16.msra.mxu0 0
    %677 = vmatpush.bf16.msra.mxu0 0
    %678 = vmatpush.bf16.msra.mxu0 %v358
    %679 = vmatpush.bf16.msra.mxu0 %v356
    %680 = vmatpush.bf16.msra.mxu0 %v354
    %681 = vmatpush.bf16.msra.mxu0 %v352
    %682 = vmatmul.bf16.gmra.mxu0 %v659
    %v683 = vpop.f32.mrf.mxu0
    %v684 = vadd.f32 0.0, %v683
    %v685 = vpop.f32.mrf.mxu0
    %686 = vdwg.mxu0
    %v687 = vadd.f32 %v652, %v671
    %v688 = vadd.f32 %v653, %v684
    %v689 = vsub.f32 0.0, %v687
    %v690 = vsub.f32 0.0, %v688
    %v691 = vmul.f32 %v689, 1.442695
    %v692 = vpow.pop %v691
    %v693 = vmul.f32 %v690, 1.442695
    %v694 = vpow.pop %v693
    %v695 = vadd.f32 %v692, 1.0
    %v696 = vadd.f32 %v694, 1.0
    %v697 = vrcp.pop %v695
    %v698 = vrcp.pop %v696
    %v699 = vtanh.pop %v688
    %v700 = vmul.f32 %v697, %v648
    %v701 = vmul.f32 %v697, %v699
    %703 = vrot.lane.b32.xlu0 %v701, 64
    %v704 = vpop.permute.xlu0 %703
    %v706 = vadd.f32 %v700, %v704
    %v707 = vtanh.pop %v706
    %v708 = vmul.f32 %v698, %v707
    %s709 = scalar_lea.vmem [#allocation2], 96
    %v710 = vld [vmem:[%s709] sm:$0xff]
    %v711 = vld [vmem:[%s709 + $0x8] sm:$0xff]
    %v712 = vpack.c.bf16 %v708, %v708
    %714 = vrot.lane.b32.xlu0 %v712, 64
    %v715 = vpop.permute.xlu0 %714
    %v717 = vsel %vm367, %v715, 0
    %719 = vmatpush.bf16.msra.mxu0 0
    %720 = vmatpush.bf16.msra.mxu0 0
    %721 = vmatpush.bf16.msra.mxu0 0
    %722 = vmatpush.bf16.msra.mxu0 0
    %723 = vmatpush.bf16.msra.mxu0 %v357
    %724 = vmatpush.bf16.msra.mxu0 %v355
    %725 = vmatpush.bf16.msra.mxu0 %v353
    %726 = vmatpush.bf16.msra.mxu0 %v351
    %727 = vmatmul.bf16.gmra.mxu0 %v717
    %v728 = vpop.f32.mrf.mxu0
    %v729 = vadd.f32 0.0, %v728
    %v730 = vpop.f32.mrf.mxu0
    %731 = vdwg.mxu0
    %732 = vmatpush.bf16.msra.mxu0 0
    %733 = vmatpush.bf16.msra.mxu0 0
    %734 = vmatpush.bf16.msra.mxu0 0
    %735 = vmatpush.bf16.msra.mxu0 0
    %736 = vmatpush.bf16.msra.mxu0 %v358
    %737 = vmatpush.bf16.msra.mxu0 %v356
    %738 = vmatpush.bf16.msra.mxu0 %v354
    %739 = vmatpush.bf16.msra.mxu0 %v352
    %740 = vmatmul.bf16.gmra.mxu0 %v717
    %v741 = vpop.f32.mrf.mxu0
    %v742 = vadd.f32 0.0, %v741
    %v743 = vpop.f32.mrf.mxu0
    %744 = vdwg.mxu0
    %v745 = vadd.f32 %v710, %v729
    %v746 = vadd.f32 %v711, %v742
    %v747 = vsub.f32 0.0, %v745
    %v748 = vsub.f32 0.0, %v746
    %v749 = vmul.f32 %v747, 1.442695
    %v750 = vpow.pop %v749
    %v751 = vmul.f32 %v748, 1.442695
    %v752 = vpow.pop %v751
    %v753 = vadd.f32 %v750, 1.0
    %v754 = vadd.f32 %v752, 1.0
    %v755 = vrcp.pop %v753
    %v756 = vrcp.pop %v754
    %v757 = vtanh.pop %v746
    %v758 = vmul.f32 %v755, %v706
    %v759 = vmul.f32 %v755, %v757
    %761 = vrot.lane.b32.xlu0 %v759, 64
    %v762 = vpop.permute.xlu0 %761
    %v764 = vadd.f32 %v758, %v762
    %v765 = vtanh.pop %v764
    %v766 = vmul.f32 %v756, %v765
    %s767 = scalar_lea.vmem [#allocation2], 112
    %v768 = vld [vmem:[%s767] sm:$0xff]
    %v769 = vld [vmem:[%s767 + $0x8] sm:$0xff]
    %v770 = vpack.c.bf16 %v766, %v766
    %772 = vrot.lane.b32.xlu0 %v770, 64
    %v773 = vpop.permute.xlu0 %772
    %v775 = vsel %vm367, %v773, 0
    %777 = vmatpush.bf16.msra.mxu0 0
    %778 = vmatpush.bf16.msra.mxu0 0
    %779 = vmatpush.bf16.msra.mxu0 0
    %780 = vmatpush.bf16.msra.mxu0 0
    %781 = vmatpush.bf16.msra.mxu0 %v357
    %782 = vmatpush.bf16.msra.mxu0 %v355
    %783 = vmatpush.bf16.msra.mxu0 %v353
    %784 = vmatpush.bf16.msra.mxu0 %v351
    %785 = vmatmul.bf16.gmra.mxu0 %v775
    %v786 = vpop.f32.mrf.mxu0
    %v787 = vadd.f32 0.0, %v786
    %v788 = vpop.f32.mrf.mxu0
    %789 = vdwg.mxu0
    %790 = vmatpush.bf16.msra.mxu0 0
    %791 = vmatpush.bf16.msra.mxu0 0
    %792 = vmatpush.bf16.msra.mxu0 0
    %793 = vmatpush.bf16.msra.mxu0 0
    %794 = vmatpush.bf16.msra.mxu0 %v358
    %795 = vmatpush.bf16.msra.mxu0 %v356
    %796 = vmatpush.bf16.msra.mxu0 %v354
    %797 = vmatpush.bf16.msra.mxu0 %v352
    %798 = vmatmul.bf16.gmra.mxu0 %v775
    %v799 = vpop.f32.mrf.mxu0
    %v800 = vadd.f32 0.0, %v799
    %v801 = vpop.f32.mrf.mxu0
    %802 = vdwg.mxu0
    %v803 = vadd.f32 %v768, %v787
    %v804 = vadd.f32 %v769, %v800
    %v805 = vsub.f32 0.0, %v803
    %v806 = vsub.f32 0.0, %v804
    %v807 = vmul.f32 %v805, 1.442695
    %v808 = vpow.pop %v807
    %v809 = vmul.f32 %v806, 1.442695
    %v810 = vpow.pop %v809
    %v811 = vadd.f32 %v808, 1.0
    %v812 = vadd.f32 %v810, 1.0
    %v813 = vrcp.pop %v811
    %v814 = vrcp.pop %v812
    %v815 = vtanh.pop %v804
    %v816 = vmul.f32 %v813, %v764
    %v817 = vmul.f32 %v813, %v815
    %819 = vrot.lane.b32.xlu0 %v817, 64
    %v820 = vpop.permute.xlu0 %819
    %v822 = vadd.f32 %v816, %v820
    %v823 = vtanh.pop %v822
    %v824 = vmul.f32 %v814, %v823
    %v825 = vpack.c.bf16 %v824, %v824
    %v826 = vld [vmem:[#allocation9] sm:$0xf]
    %v827 = vld [vmem:[#allocation9 + $0x4] sm:$0xf]
    %v828 = vld [vmem:[#allocation9 + $0x8] sm:$0xf]
    %v829 = vld [vmem:[#allocation9 + $0xc] sm:$0xf]
    %v830 = vld [vmem:[#allocation9 + $0x10] sm:$0xf]
    %v831 = vld [vmem:[#allocation9 + $0x14] sm:$0xf]
    %v832 = vld [vmem:[#allocation9 + $0x18] sm:$0xf]
    %v833 = vld [vmem:[#allocation9 + $0x1c] sm:$0xf]
    %v834 = vld [vmem:[%s5] sm:$0x1]
    %v836 = vperm.slane %v834, 0
    %839 = vrot.lane.b32.xlu0 %v825, 64
    %v840 = vpop.permute.xlu0 %839
    %v849 = vunpack.c.l.b16 %v826
    %v850 = vunpack.c.l.b16 %v827
    %v851 = vunpack.c.l.b16 %v828
    %v852 = vunpack.c.l.b16 %v829
    %v853 = vunpack.c.l.b16 %v830
    %v854 = vunpack.c.l.b16 %v831
    %v855 = vunpack.c.l.b16 %v832
    %v856 = vunpack.c.l.b16 %v833
    %v857 = vpack.c.b16 %v850, %v849
    %v858 = vpack.c.b16 %v852, %v851
    %v859 = vpack.c.b16 %v854, %v853
    %v860 = vpack.c.b16 %v856, %v855
    %v866 = vsel %vm367, %v840, 0
    %868 = vmatpush.bf16.msra.mxu0 0
    %869 = vmatpush.bf16.msra.mxu0 0
    %870 = vmatpush.bf16.msra.mxu0 0
    %871 = vmatpush.bf16.msra.mxu0 0
    %872 = vmatpush.bf16.msra.mxu0 %v860
    %873 = vmatpush.bf16.msra.mxu0 %v859
    %874 = vmatpush.bf16.msra.mxu0 %v858
    %875 = vmatpush.bf16.msra.mxu0 %v857
    %876 = vmatmul.bf16.gmra.mxu0 %v866
    %v877 = vpop.f32.mrf.mxu0
    %v878 = vadd.f32 %v836, %v877
    %v879 = vpop.f32.mrf.mxu0
    %880 = vdwg.mxu0
    %v881 = vmax.f32 %v878, 0.0
    %v882 = vpack.c.bf16 %v881, %v881
    %v883 = vld [vmem:[#allocation11] sm:$0xf]
    %v884 = vld [vmem:[#allocation11 + $0x4] sm:$0xf]
    %v885 = vld [vmem:[#allocation11 + $0x8] sm:$0xf]
    %v886 = vld [vmem:[#allocation11 + $0xc] sm:$0xf]
    %v887 = vld [vmem:[#allocation11 + $0x10] sm:$0xf]
    %v888 = vld [vmem:[#allocation11 + $0x14] sm:$0xf]
    %v889 = vld [vmem:[#allocation11 + $0x18] sm:$0xf]
    %v890 = vld [vmem:[#allocation11 + $0x1c] sm:$0xf]
    %v891 = vld [vmem:[#allocation11 + $0x20] sm:$0xf]
    %v892 = vld [vmem:[#allocation11 + $0x24] sm:$0xf]
    %v893 = vld [vmem:[#allocation11 + $0x28] sm:$0xf]
    %v894 = vld [vmem:[#allocation11 + $0x2c] sm:$0xf]
    %v895 = vld [vmem:[#allocation11 + $0x30] sm:$0xf]
    %v896 = vld [vmem:[#allocation11 + $0x34] sm:$0xf]
    %v897 = vld [vmem:[#allocation11 + $0x38] sm:$0xf]
    %v898 = vld [vmem:[#allocation11 + $0x3c] sm:$0xf]
    %v899 = vld [vmem:[%s7] sm:$0x1]
    %v901 = vperm.slane %v899, 0
    %v919 = vunpack.c.l.b16 %v883
    %v920 = vunpack.c.l.b16 %v884
    %v921 = vunpack.c.l.b16 %v885
    %v922 = vunpack.c.l.b16 %v886
    %v923 = vunpack.c.l.b16 %v887
    %v924 = vunpack.c.l.b16 %v888
    %v925 = vunpack.c.l.b16 %v889
    %v926 = vunpack.c.l.b16 %v890
    %v927 = vunpack.c.l.b16 %v891
    %v928 = vunpack.c.l.b16 %v892
    %v929 = vunpack.c.l.b16 %v893
    %v930 = vunpack.c.l.b16 %v894
    %v931 = vunpack.c.l.b16 %v895
    %v932 = vunpack.c.l.b16 %v896
    %v933 = vunpack.c.l.b16 %v897
    %v934 = vunpack.c.l.b16 %v898
    %v935 = vpack.c.b16 %v920, %v919
    %v936 = vpack.c.b16 %v922, %v921
    %v937 = vpack.c.b16 %v924, %v923
    %v938 = vpack.c.b16 %v926, %v925
    %v939 = vpack.c.b16 %v928, %v927
    %v940 = vpack.c.b16 %v930, %v929
    %v941 = vpack.c.b16 %v932, %v931
    %v942 = vpack.c.b16 %v934, %v933
    %951 = vmatpush.bf16.msra.mxu0 %v942
    %952 = vmatpush.bf16.msra.mxu0 %v941
    %953 = vmatpush.bf16.msra.mxu0 %v940
    %954 = vmatpush.bf16.msra.mxu0 %v939
    %955 = vmatpush.bf16.msra.mxu0 %v938
    %956 = vmatpush.bf16.msra.mxu0 %v937
    %957 = vmatpush.bf16.msra.mxu0 %v936
    %958 = vmatpush.bf16.msra.mxu0 %v935
    %959 = vmatmul.bf16.gmra.mxu0 %v882
    %v960 = vpop.f32.mrf.mxu0
    %v961 = vadd.f32 %v901, %v960
    %v962 = vpop.f32.mrf.mxu0
    %963 = vdwg.mxu0
    %964 = vst [vmem:[#allocation12] sm:$0xff] %v961
    // Predicated region
    $region54: #{tpu_custom_call.1} parent=1 // pred_check
      _
    $region55: #{tpu_custom_call.1} parent=1 // pred_check_branch
      %966 = sbr.rel (0) target = $region57
    $region56: #{tpu_custom_call.1} parent=1 // pred_region
      %968 = vsyncadd [#allocation5], 0
      %s970 = sshll.u32 [#allocation12], 4
      %s971 = int_to_ptr.vmem [resolvable:$true] %s970
      %s972 = sshll.u32 %s8, 4
      %s973 = int_to_ptr.hbm [resolvable:$true] %s972
      %975 = dma.vmem_to_hbm [thread:$0]  %s971, 128, %s973, [#allocation5]
    $region57: #{tpu_custom_call.1} parent=1 // pred_fallthru
      _
    // Predicated region
    $region58: #{tpu_custom_call.1} parent=1 // pred_check
      _
    $region59: #{tpu_custom_call.1} parent=1 // pred_check_branch
      %977 = sbr.rel (0) target = $region61
    $region60: #{tpu_custom_call.1} parent=1 // pred_region
      %979 = dma.done [#allocation5], 128
    $region61: #{tpu_custom_call.1} parent=1 // pred_fallthru
      _
    %980 = vsyncpa [#allocation4], 1
    %981 = vsyncpa [#allocation7], 1
    %982 = vsyncpa [#allocation10], 1
    %983 = vsyncpa [#allocation5], 1

</llo_original>
